<compile_context>
chip_gen: v5e
topology: v5e:2x2
jax: 0.10.0
libtpu: 0.0.40
codegen_flags: <defaults>
</compile_context>

<pallas_src>
import jax
import jax.numpy as jnp
from jax.experimental import pallas as pl
from jax.experimental.pallas import tpu as pltpu

EPSILON = 1e-8
BN_EPS = 1e-5
K_NN = 3


# ----------------------------------------------------------------------------
# Fused kernel: per (batch b, fine-tile t)
#   t==0:  f1 = relu(W1s @ x1 + sh1)          (Cout, N1)  -> bf16 VMEM scratch
#   f2   = relu(W2s @ x2_tile + sh2)          (Cout, TN2)
#   d2[i,j] = |p1_i - p2_j|^2                 (N1, TN2)
#   3-NN:  w has 3 nonzeros per column = 1/(dist+eps) of the selected rows
#   y_tile = f2 + (f1 @ w) / sum_k 1/(dist_k+eps)   (Cout, TN2), lane-dense store
# ----------------------------------------------------------------------------
def _transition_up_kernel(p1_ref, p2t_ref, x1_ref, x2_ref,
                          w1_ref, sh1_ref, w2_ref, sh2_ref,
                          o_ref, f1_ref):
    # ---- linear1, hoisted: once per batch into persistent bf16 scratch ------
    @pl.when(pl.program_id(1) == 0)
    def _():
        h1 = jnp.dot(w1_ref[...], x1_ref[0],
                     preferred_element_type=jnp.float32)           # (Cout, N1)
        f1_ref[...] = jnp.maximum(h1 + sh1_ref[...], 0.0).astype(jnp.bfloat16)

    # ---- linear2 on this fine tile ------------------------------------------
    f2 = jnp.dot(w2_ref[...], x2_ref[0],
                 preferred_element_type=jnp.float32)               # (Cout, TN2)
    f2 = jnp.maximum(f2 + sh2_ref[...], 0.0)

    # ---- squared distances, (N1, TN2), f32, no 3-D broadcast ----------------
    p1 = p1_ref[0]                      # (N1, 3)
    p2t = p2t_ref[0]                    # (3, TN2)
    d = p1[:, 0:1] - p2t[0:1, :]
    d2 = d * d
    d = p1[:, 1:2] - p2t[1:2, :]
    d2 = d2 + d * d
    d = p1[:, 2:3] - p2t[2:3, :]
    d2 = d2 + d * d                     # (N1, TN2)

    n1 = d2.shape[0]
    row = jax.lax.broadcasted_iota(jnp.int32, (n1, 1), 0)          # (N1, 1)

    # ---- 3-NN selection along N1 (requires N1 >= 3).  Inverse distances come
    # from the (1,TN2) column minima via the EUP reciprocal; normalization is
    # deferred until after the interpolation matmul.  First-occurrence min
    # matches top_k's lowest-index tie-break.
    w = jnp.zeros_like(d2)
    rsum = jnp.zeros((1, d2.shape[1]), jnp.float32)
    for _ in range(K_NN):
        mn = jnp.min(d2, axis=0, keepdims=True)                    # (1, TN2)
        inv = pl.reciprocal(mn + EPSILON, approx=True)             # EUP slot
        rsum = rsum + inv
        first = jnp.min(jnp.where(d2 <= mn, row, n1),
                        axis=0, keepdims=True)                     # (1, TN2)
        onehot = row == first                                      # (N1, TN2)
        w = jnp.where(onehot, inv, w)                              # sublane bcast
        d2 = jnp.where(onehot, jnp.inf, d2)                        # reuse d2

    # ---- interpolation as (Cout,N1)@(N1,TN2) MXU matmul; normalize after ----
    up = jnp.dot(f1_ref[...], w.astype(jnp.bfloat16),
                 preferred_element_type=jnp.float32)               # (Cout, TN2)
    o_ref[0] = f2 + up * pl.reciprocal(rsum, approx=True)


# ----------------------------------------------------------------------------
# VMEM budgets: conservative on v7x (64 MiB physical), larger on v5e/v6e.
# ----------------------------------------------------------------------------
def _vmem_budgets():
    try:
        cap = int(pltpu.get_tpu_info().vmem_capacity_bytes)
    except Exception:
        cap = 64 << 20                              # assume the smallest (v7x)
    budget = min(int(cap * 0.5), 40 << 20)          # working-set target
    vmem_limit = int(min(cap - (8 << 20), budget + (16 << 20)))
    return budget, vmem_limit


# ----------------------------------------------------------------------------
# Tile picker: account for everything resident in VMEM -- double-buffered
# blocks (p1 lane-padded from (N1,3) to (N1,128), bf16 features, f32 output),
# folded weights/shifts, the f1 scratch, and the large in-kernel temporaries.
# ----------------------------------------------------------------------------
def _pick_tile_n2(n2p, n1, cin, cskip, cout, budget_bytes, max_tile):
    def pad8(c):
        return ((c + 7) // 8) * 8

    fixed = (2 * n1 * 128 * 4                       # p1 block (lane-padded) x2
             + 2 * pad8(cin) * n1 * 2               # x1 block (bf16) x2
             + pad8(cout) * n1 * 2                  # f1 scratch (bf16)
             + 2 * (pad8(cout) * 128 * 2) * 2       # w1s/w2s (lane-padded) x2
             + 2 * (pad8(cout) * 128 * 4) * 2)      # sh1/sh2 (lane-padded) x2

    def per_tile(t):
        return (2 * 8 * t * 4                       # p2t block x2
                + 2 * pad8(cskip) * t * 2           # x2 block (bf16) x2
                + 2 * pad8(cout) * t * 4            # out block (f32) x2
                + 3 * n1 * t * 4                    # d2 / w / selection temps
                + 3 * pad8(cout) * t * 4)           # f2 / up / store temps

    best = 128
    t = 128
    while t <= min(max_tile, n2p):
        if n2p % t == 0 and fixed + per_tile(t) <= budget_bytes:
            best = t
        t += 128
    return best


# ----------------------------------------------------------------------------
# Module wrapper
# ----------------------------------------------------------------------------
def transition_up(p1x1, p2x2, params, *, max_tile_n2=1024):
    (p1, x1), (p2, x2) = p1x1, p2x2
    B, N1, _ = p1.shape
    _, N2, _ = p2.shape
    Cin = x1.shape[1]
    Cskip = x2.shape[1]

    w1, g1, b1, m1, v1 = params["linear1"]
    w2, g2, b2, m2, v2 = params["linear2"]
    Cout = w1.shape[0]

    # Fold BN (eval mode) into the conv weights; keep only a per-channel shift.
    s1 = g1 / jnp.sqrt(v1 + BN_EPS)
    w1s = (w1 * s1[:, None]).astype(jnp.bfloat16)                  # (Cout, Cin)
    sh1 = (b1 - m1 * s1).astype(jnp.float32).reshape(Cout, 1)
    s2 = g2 / jnp.sqrt(v2 + BN_EPS)
    w2s = (w2 * s2[:, None]).astype(jnp.bfloat16)                  # (Cout, Cskip)
    sh2 = (b2 - m2 * s2).astype(jnp.float32).reshape(Cout, 1)

    # Pad the fine axis to a multiple of 128 so it can always be tiled.
    N2p = max(128, ((N2 + 127) // 128) * 128)
    pad = N2p - N2

    p1f = p1.astype(jnp.float32)                                   # (B, N1, 3)
    p2t = jnp.transpose(p2, (0, 2, 1)).astype(jnp.float32)         # (B, 3, N2) tiny
    x1b = x1.astype(jnp.bfloat16)                                  # (B, Cin, N1)
    x2b = x2.astype(jnp.bfloat16)                                  # (B, Cskip, N2)
    if pad:
        p2t = jnp.pad(p2t, ((0, 0), (0, 0), (0, pad)))
        x2b = jnp.pad(x2b, ((0, 0), (0, 0), (0, pad)))

    budget, vmem_limit = _vmem_budgets()
    tn2 = _pick_tile_n2(N2p, N1, Cin, Cskip, Cout, budget, max_tile_n2)
    grid = (B, N2p // tn2)

    y = pl.pallas_call(
        _transition_up_kernel,
        out_shape=jax.ShapeDtypeStruct((B, Cout, N2p), jnp.float32),
        grid=grid,
        in_specs=[
            pl.BlockSpec((1, N1, 3), lambda b, t: (b, 0, 0)),       # p1
            pl.BlockSpec((1, 3, tn2), lambda b, t: (b, 0, t)),      # p2 (transposed)
            pl.BlockSpec((1, Cin, N1), lambda b, t: (b, 0, 0)),     # x1 (bf16, not re-DMA'd over t)
            pl.BlockSpec((1, Cskip, tn2), lambda b, t: (b, 0, t)),  # x2 tile (bf16)
            pl.BlockSpec((Cout, Cin), lambda b, t: (0, 0)),         # W1 * bn_scale (bf16)
            pl.BlockSpec((Cout, 1), lambda b, t: (0, 0)),           # bn shift 1
            pl.BlockSpec((Cout, Cskip), lambda b, t: (0, 0)),       # W2 * bn_scale (bf16)
            pl.BlockSpec((Cout, 1), lambda b, t: (0, 0)),           # bn shift 2
        ],
        out_specs=pl.BlockSpec((1, Cout, tn2), lambda b, t: (b, 0, t)),
        scratch_shapes=[pltpu.VMEM((Cout, N1), jnp.bfloat16)],      # persistent f1
        compiler_params=pltpu.CompilerParams(
            dimension_semantics=("parallel", "arbitrary"),
            vmem_limit_bytes=vmem_limit),
    )(p1f, p2t, x1b, x2b, w1s, sh1, w2s, sh2)

    return [p2, y[:, :, :N2]]


# ----------------------------------------------------------------------------
# Pure-JAX reference with the same bf16-matmul rounding points (tolerance below
# covers MXU accumulation order, bf16 rounding, and the approx reciprocals).
# ----------------------------------------------------------------------------
def _transition_up_ref(p1x1, p2x2, params):
    (p1, x1), (p2, x2) = p1x1, p2x2

    def lin(x, prm):
        w, g, b, m, v = prm
        s = g / jnp.sqrt(v + BN_EPS)
        ws = (w * s[:, None]).astype(jnp.bfloat16)
        sh = b - m * s
        h = jnp.einsum("oc,bcn->bon", ws, x.astype(jnp.bfloat16),
                       preferred_element_type=jnp.float32)
        return jnp.maximum(h + sh[None, :, None], 0.0)

    f1 = lin(x1, params["linear1"])                                 # (B, Cout, N1)
    f2 = lin(x2, params["linear2"])                                 # (B, Cout, N2)

    diff = p2[:, :, None, :] - p1[:, None, :, :]                    # (B, N2, N1, 3)
    d2 = diff[..., 0] ** 2 + diff[..., 1] ** 2 + diff[..., 2] ** 2  # (B, N2, N1)
    _, idx = jax.lax.top_k(-d2, K_NN)                               # (B, N2, 3)
    dist = jnp.take_along_axis(d2, idx, axis=-1)
    dr = 1.0 / (dist + EPSILON)
    w = dr * (1.0 / jnp.sum(dr, axis=-1, keepdims=True))            # (B, N2, 3)

    f1_nlc = jnp.transpose(f1, (0, 2, 1))                           # (B, N1, C)
    gathered = jnp.take_along_axis(f1_nlc[:, None, :, :],
                                   idx[:, :, :, None], axis=2)      # (B, N2, 3, C)
    up = jnp.einsum("bnk,bnkc->bnc", w.astype(jnp.bfloat16),
                    gathered.astype(jnp.bfloat16),
                    preferred_element_type=jnp.float32)             # (B, N2, C)
    y = f2 + jnp.transpose(up, (0, 2, 1))
    return [p2, y]


# ----------------------------------------------------------------------------
# Deterministic parameter construction + demo
# ----------------------------------------------------------------------------
def make_params(key, in_channels, out_channels, skip_channels):
    k1, k2 = jax.random.split(key)

    def branch(k, cin, cout):
        w = jax.random.normal(k, (cout, cin), jnp.float32) * 0.1    # Conv1d weight (k=1)
        gamma = 1.0 + 0.05 * jnp.arange(cout, dtype=jnp.float32)
        beta = 0.02 * jnp.arange(cout, dtype=jnp.float32)
        mean = 0.01 * jnp.arange(cout, dtype=jnp.float32)
        var = 1.0 + 0.03 * jnp.arange(cout, dtype=jnp.float32)
        return (w, gamma, beta, mean, var)

    return {"linear1": branch(k1, in_channels, out_channels),
            "linear2": branch(k2, skip_channels, out_channels)}


if __name__ == "__main__":
    B, C_in, C_skip, C_out = 2, 8, 8, 16
    N1, N2 = 16, 32                      # coarse / fine point counts

    key = jax.random.PRNGKey(0)
    kp1, kp2, kx1, kx2, kw = jax.random.split(key, 5)
    p1 = jax.random.normal(kp1, (B, N1, 3), jnp.float32)
    p2 = jax.random.normal(kp2, (B, N2, 3), jnp.float32)
    x1 = jax.random.normal(kx1, (B, C_in, N1), jnp.float32)
    x2 = jax.random.normal(kx2, (B, C_skip, N2), jnp.float32)
    params = make_params(kw, C_in, C_out, C_skip)

    p_out, y = transition_up((p1, x1), (p2, x2), params)
    jax.block_until_ready(y)

    _, y_ref = _transition_up_ref((p1, x1), (p2, x2), params)
    assert y.shape == (B, C_out, N2), y.shape
    max_err = float(jnp.max(jnp.abs(y - y_ref)))
    assert jnp.allclose(y, y_ref, atol=3e-2, rtol=3e-2), max_err

    print("KERNEL_OK")
</pallas_src>

<mosaic_0001>
module attributes {stable_mosaic.version = 11 : i64} {
  func.func @_transition_up_kernel(%arg0: i32, %arg1: i32, %arg2: memref<1x16x3xf32, #tpu.memory_space<vmem>>, %arg3: memref<1x3x128xf32, #tpu.memory_space<vmem>>, %arg4: memref<1x8x16xbf16, #tpu.memory_space<vmem>>, %arg5: memref<1x8x128xbf16, #tpu.memory_space<vmem>>, %arg6: memref<16x8xbf16, #tpu.memory_space<vmem>>, %arg7: memref<16x1xf32, #tpu.memory_space<vmem>>, %arg8: memref<16x8xbf16, #tpu.memory_space<vmem>>, %arg9: memref<16x1xf32, #tpu.memory_space<vmem>>, %arg10: memref<1x16x128xf32, #tpu.memory_space<vmem>>, %arg11: memref<16x16xbf16, #tpu.memory_space<vmem>>) attributes {dimension_semantics = [#tpu.dimension_semantics<parallel>, #tpu.dimension_semantics<arbitrary>], iteration_bounds = array<i64: 2, 1>, scalar_prefetch = 0 : i64, scratch_operands = 1 : i64, tpu.core_type = #tpu.core_type<tc>, window_params = [{transform_indices = @transform_0, window_bounds = array<i64: 1, 16, 3>}, {transform_indices = @transform_1, window_bounds = array<i64: 1, 3, 128>}, {transform_indices = @transform_2, window_bounds = array<i64: 1, 8, 16>}, {transform_indices = @transform_3, window_bounds = array<i64: 1, 8, 128>}, {pipeline_mode = #tpu.pipeline_mode<synchronous>, transform_indices = @transform_4, window_bounds = array<i64: 16, 8>}, {pipeline_mode = #tpu.pipeline_mode<synchronous>, transform_indices = @transform_5, window_bounds = array<i64: 16, 1>}, {pipeline_mode = #tpu.pipeline_mode<synchronous>, transform_indices = @transform_6, window_bounds = array<i64: 16, 8>}, {pipeline_mode = #tpu.pipeline_mode<synchronous>, transform_indices = @transform_7, window_bounds = array<i64: 16, 1>}, {transform_indices = @transform_8, window_bounds = array<i64: 1, 16, 128>}]} {
    %c0_i32 = arith.constant 0 : i32
    %0 = arith.cmpi eq, %arg1, %c0_i32 : i32
    %1 = arith.extui %0 : i1 to i32
    %c0_i32_0 = arith.constant 0 : i32
    %2 = arith.cmpi ne, %1, %c0_i32_0 : i32
    scf.if %2 {
      %c0_35 = arith.constant 0 : index
      %c0_36 = arith.constant 0 : index
      %113 = vector.load %arg6[%c0_35, %c0_36] : memref<16x8xbf16, #tpu.memory_space<vmem>>, vector<16x8xbf16>
      %c0_37 = arith.constant 0 : index
      %c0_38 = arith.constant 0 : index
      %c0_39 = arith.constant 0 : index
      %114 = vector.load %arg4[%c0_37, %c0_38, %c0_39] : memref<1x8x16xbf16, #tpu.memory_space<vmem>>, vector<1x8x16xbf16>
      %115 = vector.shape_cast %114 : vector<1x8x16xbf16> to vector<8x16xbf16>
      %cst_40 = arith.constant dense<0.000000e+00> : vector<16x16xf32>
      %116 = tpu.matmul %113, %115, %cst_40 {dimension_numbers = #tpu.dot_dimension_numbers<[1], [0], [0], [1], [0, 0, 1, 1], [], []>} : vector<16x8xbf16>, vector<8x16xbf16>, vector<16x16xf32> -> vector<16x16xf32>
      %c0_41 = arith.constant 0 : index
      %c0_42 = arith.constant 0 : index
      %117 = vector.load %arg7[%c0_41, %c0_42] : memref<16x1xf32, #tpu.memory_space<vmem>>, vector<16x1xf32>
      %118 = vector.broadcast %117 : vector<16x1xf32> to vector<16x16xf32>
      %119 = arith.addf %116, %118 : vector<16x16xf32>
      %cst_43 = arith.constant 0.000000e+00 : f32
      %120 = vector.broadcast %cst_43 : f32 to vector<16x16xf32>
      %121 = arith.maximumf %119, %120 : vector<16x16xf32>
      %122 = arith.truncf %121 : vector<16x16xf32> to vector<16x16xbf16>
      %c0_44 = arith.constant 0 : index
      %c0_45 = arith.constant 0 : index
      %123 = vector.load %arg11[%c0_44, %c0_45] : memref<16x16xbf16, #tpu.memory_space<vmem>>, vector<16x16xbf16>
      tpu.vector_store %arg11[%c0_44, %c0_45], %122 {strides = array<i32>} : memref<16x16xbf16, #tpu.memory_space<vmem>>, vector<16x16xbf16>,
    } else {
    }
    %c0 = arith.constant 0 : index
    %c0_1 = arith.constant 0 : index
    %3 = vector.load %arg8[%c0, %c0_1] : memref<16x8xbf16, #tpu.memory_space<vmem>>, vector<16x8xbf16>
    %c0_2 = arith.constant 0 : index
    %c0_3 = arith.constant 0 : index
    %c0_4 = arith.constant 0 : index
    %4 = vector.load %arg5[%c0_2, %c0_3, %c0_4] : memref<1x8x128xbf16, #tpu.memory_space<vmem>>, vector<1x8x128xbf16>
    %5 = vector.shape_cast %4 : vector<1x8x128xbf16> to vector<8x128xbf16>
    %cst = arith.constant dense<0.000000e+00> : vector<16x128xf32>
    %6 = tpu.matmul %3, %5, %cst {dimension_numbers = #tpu.dot_dimension_numbers<[1], [0], [0], [1], [0, 0, 1, 1], [], []>} : vector<16x8xbf16>, vector<8x128xbf16>, vector<16x128xf32> -> vector<16x128xf32>
    %c0_5 = arith.constant 0 : index
    %c0_6 = arith.constant 0 : index
    %7 = vector.load %arg9[%c0_5, %c0_6] : memref<16x1xf32, #tpu.memory_space<vmem>>, vector<16x1xf32>
    %8 = vector.broadcast %7 : vector<16x1xf32> to vector<16x128xf32>
    %9 = arith.addf %6, %8 : vector<16x128xf32>
    %cst_7 = arith.constant 0.000000e+00 : f32
    %10 = vector.broadcast %cst_7 : f32 to vector<16x128xf32>
    %11 = arith.maximumf %9, %10 : vector<16x128xf32>
    %c0_8 = arith.constant 0 : index
    %c0_9 = arith.constant 0 : index
    %c0_10 = arith.constant 0 : index
    %12 = vector.load %arg2[%c0_8, %c0_9, %c0_10] : memref<1x16x3xf32, #tpu.memory_space<vmem>>, vector<1x16x3xf32>
    %13 = vector.shape_cast %12 : vector<1x16x3xf32> to vector<16x3xf32>
    %c0_11 = arith.constant 0 : index
    %c0_12 = arith.constant 0 : index
    %c0_13 = arith.constant 0 : index
    %14 = vector.load %arg3[%c0_11, %c0_12, %c0_13] : memref<1x3x128xf32, #tpu.memory_space<vmem>>, vector<1x3x128xf32>
    %15 = vector.shape_cast %14 : vector<1x3x128xf32> to vector<3x128xf32>
    %16 = vector.extract_strided_slice %13 {offsets = [0, 0], sizes = [16, 1], strides = [1, 1]} : vector<16x3xf32> to vector<16x1xf32>
    %17 = vector.extract_strided_slice %15 {offsets = [0, 0], sizes = [1, 128], strides = [1, 1]} : vector<3x128xf32> to vector<1x128xf32>
    %18 = vector.broadcast %16 : vector<16x1xf32> to vector<16x128xf32>
    %19 = vector.broadcast %17 : vector<1x128xf32> to vector<16x128xf32>
    %20 = arith.subf %18, %19 : vector<16x128xf32>
    %21 = arith.mulf %20, %20 : vector<16x128xf32>
    %22 = vector.extract_strided_slice %13 {offsets = [0, 1], sizes = [16, 1], strides = [1, 1]} : vector<16x3xf32> to vector<16x1xf32>
    %23 = vector.extract_strided_slice %15 {offsets = [1, 0], sizes = [1, 128], strides = [1, 1]} : vector<3x128xf32> to vector<1x128xf32>
    %24 = vector.broadcast %22 : vector<16x1xf32> to vector<16x128xf32>
    %25 = vector.broadcast %23 : vector<1x128xf32> to vector<16x128xf32>
    %26 = arith.subf %24, %25 : vector<16x128xf32>
    %27 = arith.mulf %26, %26 : vector<16x128xf32>
    %28 = arith.addf %21, %27 : vector<16x128xf32>
    %29 = vector.extract_strided_slice %13 {offsets = [0, 2], sizes = [16, 1], strides = [1, 1]} : vector<16x3xf32> to vector<16x1xf32>
    %30 = vector.extract_strided_slice %15 {offsets = [2, 0], sizes = [1, 128], strides = [1, 1]} : vector<3x128xf32> to vector<1x128xf32>
    %31 = vector.broadcast %29 : vector<16x1xf32> to vector<16x128xf32>
    %32 = vector.broadcast %30 : vector<1x128xf32> to vector<16x128xf32>
    %33 = arith.subf %31, %32 : vector<16x128xf32>
    %34 = arith.mulf %33, %33 : vector<16x128xf32>
    %35 = arith.addf %28, %34 : vector<16x128xf32>
    %36 = tpu.iota {dimensions = array<i32: 0>} : vector<16x1xi32>
    %cst_14 = arith.constant 0.000000e+00 : f32
    %37 = vector.broadcast %cst_14 : f32 to vector<16x128xf32>
    %cst_15 = arith.constant 0.000000e+00 : f32
    %38 = vector.broadcast %cst_15 : f32 to vector<1x128xf32>
    %cst_16 = arith.constant dense<0x7F800000> : vector<128xf32>
    %39 = vector.multi_reduction <minimumf>, %35, %cst_16 [0] : vector<16x128xf32> to vector<128xf32>
    %40 = vector.shape_cast %39 : vector<128xf32> to vector<1x128xf32>
    %cst_17 = arith.constant 9.99999993E-9 : f32
    %41 = vector.broadcast %cst_17 : f32 to vector<1x128xf32>
    %42 = arith.addf %40, %41 : vector<1x128xf32>
    %43 = tpu.reciprocal %42 {approx = true} : vector<1x128xf32> -> vector<1x128xf32>
    %44 = arith.addf %38, %43 : vector<1x128xf32>
    %45 = vector.broadcast %40 : vector<1x128xf32> to vector<16x128xf32>
    %46 = arith.cmpf ole, %35, %45 : vector<16x128xf32>
    %c16_i32 = arith.constant 16 : i32
    %47 = vector.shape_cast %36 : vector<16x1xi32> to vector<16x1xi32>
    %48 = vector.broadcast %47 : vector<16x1xi32> to vector<16x128xi32>
    %49 = vector.broadcast %c16_i32 : i32 to vector<16x128xi32>
    %50 = arith.select %46, %48, %49 : vector<16x128xi1>, vector<16x128xi32>
    %cst_18 = arith.constant dense<2147483647> : vector<128xi32>
    %51 = vector.multi_reduction <minsi>, %50, %cst_18 [0] : vector<16x128xi32> to vector<128xi32>
    %52 = vector.shape_cast %51 : vector<128xi32> to vector<1x128xi32>
    %53 = vector.broadcast %36 : vector<16x1xi32> to vector<16x128xi32>
    %54 = vector.broadcast %52 : vector<1x128xi32> to vector<16x128xi32>
    %55 = arith.cmpi eq, %53, %54 : vector<16x128xi32>
    %56 = vector.shape_cast %43 : vector<1x128xf32> to vector<1x128xf32>
    %57 = vector.broadcast %56 : vector<1x128xf32> to vector<16x128xf32>
    %58 = arith.select %55, %57, %37 : vector<16x128xi1>, vector<16x128xf32>
    %cst_19 = arith.constant 0x7F800000 : f32
    %59 = vector.broadcast %cst_19 : f32 to vector<16x128xf32>
    %60 = arith.select %55, %59, %35 : vector<16x128xi1>, vector<16x128xf32>
    %cst_20 = arith.constant dense<0x7F800000> : vector<128xf32>
    %61 = vector.multi_reduction <minimumf>, %60, %cst_20 [0] : vector<16x128xf32> to vector<128xf32>
    %62 = vector.shape_cast %61 : vector<128xf32> to vector<1x128xf32>
    %cst_21 = arith.constant 9.99999993E-9 : f32
    %63 = vector.broadcast %cst_21 : f32 to vector<1x128xf32>
    %64 = arith.addf %62, %63 : vector<1x128xf32>
    %65 = tpu.reciprocal %64 {approx = true} : vector<1x128xf32> -> vector<1x128xf32>
    %66 = arith.addf %44, %65 : vector<1x128xf32>
    %67 = vector.broadcast %62 : vector<1x128xf32> to vector<16x128xf32>
    %68 = arith.cmpf ole, %60, %67 : vector<16x128xf32>
    %c16_i32_22 = arith.constant 16 : i32
    %69 = vector.shape_cast %36 : vector<16x1xi32> to vector<16x1xi32>
    %70 = vector.broadcast %69 : vector<16x1xi32> to vector<16x128xi32>
    %71 = vector.broadcast %c16_i32_22 : i32 to vector<16x128xi32>
    %72 = arith.select %68, %70, %71 : vector<16x128xi1>, vector<16x128xi32>
    %cst_23 = arith.constant dense<2147483647> : vector<128xi32>
    %73 = vector.multi_reduction <minsi>, %72, %cst_23 [0] : vector<16x128xi32> to vector<128xi32>
    %74 = vector.shape_cast %73 : vector<128xi32> to vector<1x128xi32>
    %75 = vector.broadcast %36 : vector<16x1xi32> to vector<16x128xi32>
    %76 = vector.broadcast %74 : vector<1x128xi32> to vector<16x128xi32>
    %77 = arith.cmpi eq, %75, %76 : vector<16x128xi32>
    %78 = vector.shape_cast %65 : vector<1x128xf32> to vector<1x128xf32>
    %79 = vector.broadcast %78 : vector<1x128xf32> to vector<16x128xf32>
    %80 = arith.select %77, %79, %58 : vector<16x128xi1>, vector<16x128xf32>
    %cst_24 = arith.constant 0x7F800000 : f32
    %81 = vector.broadcast %cst_24 : f32 to vector<16x128xf32>
    %82 = arith.select %77, %81, %60 : vector<16x128xi1>, vector<16x128xf32>
    %cst_25 = arith.constant dense<0x7F800000> : vector<128xf32>
    %83 = vector.multi_reduction <minimumf>, %82, %cst_25 [0] : vector<16x128xf32> to vector<128xf32>
    %84 = vector.shape_cast %83 : vector<128xf32> to vector<1x128xf32>
    %cst_26 = arith.constant 9.99999993E-9 : f32
    %85 = vector.broadcast %cst_26 : f32 to vector<1x128xf32>
    %86 = arith.addf %84, %85 : vector<1x128xf32>
    %87 = tpu.reciprocal %86 {approx = true} : vector<1x128xf32> -> vector<1x128xf32>
    %88 = arith.addf %66, %87 : vector<1x128xf32>
    %89 = vector.broadcast %84 : vector<1x128xf32> to vector<16x128xf32>
    %90 = arith.cmpf ole, %82, %89 : vector<16x128xf32>
    %c16_i32_27 = arith.constant 16 : i32
    %91 = vector.shape_cast %36 : vector<16x1xi32> to vector<16x1xi32>
    %92 = vector.broadcast %91 : vector<16x1xi32> to vector<16x128xi32>
    %93 = vector.broadcast %c16_i32_27 : i32 to vector<16x128xi32>
    %94 = arith.select %90, %92, %93 : vector<16x128xi1>, vector<16x128xi32>
    %cst_28 = arith.constant dense<2147483647> : vector<128xi32>
    %95 = vector.multi_reduction <minsi>, %94, %cst_28 [0] : vector<16x128xi32> to vector<128xi32>
    %96 = vector.shape_cast %95 : vector<128xi32> to vector<1x128xi32>
    %97 = vector.broadcast %36 : vector<16x1xi32> to vector<16x128xi32>
    %98 = vector.broadcast %96 : vector<1x128xi32> to vector<16x128xi32>
    %99 = arith.cmpi eq, %97, %98 : vector<16x128xi32>
    %100 = vector.shape_cast %87 : vector<1x128xf32> to vector<1x128xf32>
    %101 = vector.broadcast %100 : vector<1x128xf32> to vector<16x128xf32>
    %102 = arith.select %99, %101, %80 : vector<16x128xi1>, vector<16x128xf32>
    %c0_29 = arith.constant 0 : index
    %c0_30 = arith.constant 0 : index
    %103 = vector.load %arg11[%c0_29, %c0_30] : memref<16x16xbf16, #tpu.memory_space<vmem>>, vector<16x16xbf16>
    %104 = arith.truncf %102 : vector<16x128xf32> to vector<16x128xbf16>
    %cst_31 = arith.constant dense<0.000000e+00> : vector<16x128xf32>
    %105 = tpu.matmul %103, %104, %cst_31 {dimension_numbers = #tpu.dot_dimension_numbers<[1], [0], [0], [1], [0, 0, 1, 1], [], []>} : vector<16x16xbf16>, vector<16x128xbf16>, vector<16x128xf32> -> vector<16x128xf32>
    %106 = tpu.reciprocal %88 {approx = true} : vector<1x128xf32> -> vector<1x128xf32>
    %107 = vector.broadcast %106 : vector<1x128xf32> to vector<16x128xf32>
    %108 = arith.mulf %105, %107 : vector<16x128xf32>
    %109 = arith.addf %11, %108 : vector<16x128xf32>
    %c0_32 = arith.constant 0 : index
    %c0_33 = arith.constant 0 : index
    %c0_34 = arith.constant 0 : index
    %110 = vector.load %arg10[%c0_32, %c0_33, %c0_34] : memref<1x16x128xf32, #tpu.memory_space<vmem>>, vector<1x16x128xf32>
    %111 = vector.shape_cast %110 : vector<1x16x128xf32> to vector<16x128xf32>
    %112 = vector.shape_cast %109 : vector<16x128xf32> to vector<1x16x128xf32>
    tpu.vector_store %arg10[%c0_32, %c0_33, %c0_34], %112 {strides = array<i32>} : memref<1x16x128xf32, #tpu.memory_space<vmem>>, vector<1x16x128xf32>,
    return
  }
  func.func @transform_0(%arg0: i32, %arg1: i32) -> (i32, i32, i32) {
    %c0_i32 = arith.constant 0 : i32
    %c0_i32_0 = arith.constant 0 : i32
    %c0_i32_1 = arith.constant 0 : i32
    return %arg0, %c0_i32, %c0_i32_0 : i32, i32, i32
  }
  func.func @transform_1(%arg0: i32, %arg1: i32) -> (i32, i32, i32) {
    %c0_i32 = arith.constant 0 : i32
    %c0_i32_0 = arith.constant 0 : i32
    return %arg0, %c0_i32, %arg1 : i32, i32, i32
  }
  func.func @transform_2(%arg0: i32, %arg1: i32) -> (i32, i32, i32) {
    %c0_i32 = arith.constant 0 : i32
    %c0_i32_0 = arith.constant 0 : i32
    %c0_i32_1 = arith.constant 0 : i32
    return %arg0, %c0_i32, %c0_i32_0 : i32, i32, i32
  }
  func.func @transform_3(%arg0: i32, %arg1: i32) -> (i32, i32, i32) {
    %c0_i32 = arith.constant 0 : i32
    %c0_i32_0 = arith.constant 0 : i32
    return %arg0, %c0_i32, %arg1 : i32, i32, i32
  }
  func.func @transform_4(%arg0: i32, %arg1: i32) -> (i32, i32) {
    %c0_i32 = arith.constant 0 : i32
    %c0_i32_0 = arith.constant 0 : i32
    %c0_i32_1 = arith.constant 0 : i32
    return %c0_i32, %c0_i32_0 : i32, i32
  }
  func.func @transform_5(%arg0: i32, %arg1: i32) -> (i32, i32) {
    %c0_i32 = arith.constant 0 : i32
    %c0_i32_0 = arith.constant 0 : i32
    %c0_i32_1 = arith.constant 0 : i32
    return %c0_i32, %c0_i32_0 : i32, i32
  }
  func.func @transform_6(%arg0: i32, %arg1: i32) -> (i32, i32) {
    %c0_i32 = arith.constant 0 : i32
    %c0_i32_0 = arith.constant 0 : i32
    %c0_i32_1 = arith.constant 0 : i32
    return %c0_i32, %c0_i32_0 : i32, i32
  }
  func.func @transform_7(%arg0: i32, %arg1: i32) -> (i32, i32) {
    %c0_i32 = arith.constant 0 : i32
    %c0_i32_0 = arith.constant 0 : i32
    %c0_i32_1 = arith.constant 0 : i32
    return %c0_i32, %c0_i32_0 : i32, i32
  }
  func.func @transform_8(%arg0: i32, %arg1: i32) -> (i32, i32, i32) {
    %c0_i32 = arith.constant 0 : i32
    %c0_i32_0 = arith.constant 0 : i32
    return %arg0, %c0_i32, %arg1 : i32, i32, i32
  }
}

</mosaic_0001>

<llo_original>
// kernel: tpu_custom_call.1
$region0: #{tpu_custom_call.1}
  #allocation0 [shape = 'u32[]', space=smem, size = 0x4, offset = 0x4, fixed_abs, tag = 'smem constant byte address 0x4 - core index']
  #allocation1 [shape = 'u32[72,128]{1,0:T(1,128)}', space=vmem, size = 0x9000, scoped, tag = 'internal scratch']
  #allocation2 [shape = 'bf16[16,16]{1,0:T(8,128)(2,1)}', space=vmem, size = 0x1000, scoped, tag = 'scratch operand']
  %s0 = inlined_call_operand.vmem [shape: f32[2,16,3], index: 0, kind: input, shape index: {}]
  %s1 = inlined_call_operand.vmem [shape: f32[2,3,128], index: 1, kind: input, shape index: {}]
  %s2 = inlined_call_operand.vmem [shape: bf16[2,8,16], index: 2, kind: input, shape index: {}]
  %s3 = inlined_call_operand.vmem [shape: bf16[2,8,128], index: 3, kind: input, shape index: {}]
  %s4 = inlined_call_operand.vmem [shape: bf16[16,8], index: 4, kind: input, shape index: {}]
  %s5 = inlined_call_operand.vmem [shape: f32[16,1], index: 5, kind: input, shape index: {}]
  %s6 = inlined_call_operand.vmem [shape: bf16[16,8], index: 6, kind: input, shape index: {}]
  %s7 = inlined_call_operand.vmem [shape: f32[16,1], index: 7, kind: input, shape index: {}]
  %s8 = inlined_call_operand.hbm [shape: f32[2,16,128], index: 8, kind: output, shape index: {}]
  %s9 = sld [smem:[#allocation0]]
  $region69: #{tpu_custom_call.1} parent=0
    _
  %s11 = ssub.s32 1, %s9
  %s12 = scalar_select 0, %s11, %s9
  $region1: #{tpu_custom_call.1} parent=0
    #allocation3 [shape = 'u8[16384]{0}', space=vmem, size = 0x4000, scoped, tag = 'output window, operand 0']
    #allocation4 [shape = 's32[2]{0}', space=sflag, size = 0x8, scoped, tag = 'scoped memory for tpu_custom_call.1']
    %13 = vsyncpa [#allocation4], 0
    %s14 = scalar_lea.sflag [#allocation4], 1
    %15 = vsyncpa %s14, 0
    loop: start=0, step=1, limit=4
    $region2: #{tpu_custom_call.1} parent=1 // loop_pre_header
      _
    $region3: #{tpu_custom_call.1} parent=1 // loop_header
      %s17 = sphi 0, %s21
      %p18 = scmp.ge.s32.totalorder %s17, 4
      %s24 = sphi 0, %s36
      %s25 = sphi 0, %s32
      %s26 = sphi 0, %s24
      %s27 = sphi 0, %s25
      %s28 = sphi 0, %s26
      %s29 = sphi 0, %s27
      %s39 = sphi 0, %s41
      %s42 = sphi 0, %s39
      %s43 = sphi 0, %s42
      %s59 = sphi 0, %s43
      %s67 = sphi 0, %s69
      %s70 = sphi 0, %s67
      %s71 = sphi 0, %s70
      %s87 = sphi 0, %s71
      %s93 = sphi 0, %s95
      %s96 = sphi 0, %s93
      %s97 = sphi 0, %s96
      %s113 = sphi 0, %s97
      %s121 = sphi 0, %s123
      %s124 = sphi 0, %s121
      %s125 = sphi 0, %s124
      %s141 = sphi 0, %s125
      %s145 = sphi 0, %s145
      %s147 = sphi 0, %s145
      %s148 = sphi 0, %s147
      %s162 = sphi 0, %s148
      %s166 = sphi 0, %s166
      %s168 = sphi 0, %s166
      %s169 = sphi 0, %s168
      %s183 = sphi 0, %s169
      %s187 = sphi 0, %s187
      %s189 = sphi 0, %s187
      %s190 = sphi 0, %s189
      %s204 = sphi 0, %s190
      %s208 = sphi 0, %s208
      %s210 = sphi 0, %s208
      %s211 = sphi 0, %s210
      %s225 = sphi 0, %s211
      %s233 = sphi 0, %s235
      %s236 = sphi 0, %s233
      %s237 = sphi 0, %s236
      %s253 = sphi 0, %s237
    $region4: #{tpu_custom_call.1} parent=1 // loop_header_branch
      %20 = sbr.rel (%p18) target = $region8
    $region5: #{tpu_custom_call.1} parent=1 // loop_body
      %s22 = ssub.s32 %s17, 1
      %s23 = ssub.s32 %s17, 2
      %s30 = sadd.s32 1, %s25
      %p31 = scmp.ge.s32.totalorder %s30, 1
      %s32 = scalar_select %p31, 0, %s30
      %s33 = sadd.s32 1, %s24
      %s34 = scalar_select %p31, %s33, %s24
      %p35 = scmp.ge.s32.totalorder %s34, 2
      %s36 = scalar_select %p35, 0, %s34
      %s37 = ssub.s32 %s24, %s36
      %p38 = scmp.eq.s32.totalorder %s37, 0
      %s40 = sadd.s32 %s39, 1
      %s41 = scalar_select %p38, %s39, %s40
      %p44 = pneg %p38
      %p45 = scmp.eq.s32.totalorder %s17, 1
      %p46 = por %p44, %p45
      %p47 = scmp.ne.s32.totalorder %s39, %s42
      %p48 = scmp.eq.s32.totalorder %s17, 0
      %p49 = por %p47, %p48
      %p50 = scmp.ne.s32.totalorder %s39, %s42
      %p51 = scmp.eq.s32.totalorder %s22, 1
      %p52 = por %p50, %p51
      %p53 = scmp.ne.s32.totalorder %s42, %s43
      %p54 = scmp.eq.s32.totalorder %s22, 0
      %p55 = por %p53, %p54
      %p56 = scmp.ne.s32.totalorder %s42, %s43
      %p57 = scmp.eq.s32.totalorder %s23, 1
      %p58 = por %p56, %p57
      %p60 = scmp.ne.s32.totalorder %s43, %s59
      %p61 = scmp.eq.s32.totalorder %s23, 0
      %p62 = por %p60, %p61
      %s63 = ssub.s32 %s24, %s36
      %s64 = ssub.s32 %s25, %s32
      %s65 = sor.u32 %s63, %s64
      %p66 = scmp.eq.s32.totalorder %s65, 0
      %s68 = sadd.s32 %s67, 1
      %s69 = scalar_select %p66, %s67, %s68
      %p72 = pneg %p66
      %p73 = scmp.eq.s32.totalorder %s17, 1
      %p74 = por %p72, %p73
      %p75 = scmp.ne.s32.totalorder %s67, %s70
      %p76 = scmp.eq.s32.totalorder %s17, 0
      %p77 = por %p75, %p76
      %p78 = scmp.ne.s32.totalorder %s67, %s70
      %p79 = scmp.eq.s32.totalorder %s22, 1
      %p80 = por %p78, %p79
      %p81 = scmp.ne.s32.totalorder %s70, %s71
      %p82 = scmp.eq.s32.totalorder %s22, 0
      %p83 = por %p81, %p82
      %p84 = scmp.ne.s32.totalorder %s70, %s71
      %p85 = scmp.eq.s32.totalorder %s23, 1
      %p86 = por %p84, %p85
      %p88 = scmp.ne.s32.totalorder %s71, %s87
      %p89 = scmp.eq.s32.totalorder %s23, 0
      %p90 = por %p88, %p89
      %s91 = ssub.s32 %s24, %s36
      %p92 = scmp.eq.s32.totalorder %s91, 0
      %s94 = sadd.s32 %s93, 1
      %s95 = scalar_select %p92, %s93, %s94
      %p98 = pneg %p92
      %p99 = scmp.eq.s32.totalorder %s17, 1
      %p100 = por %p98, %p99
      %p101 = scmp.ne.s32.totalorder %s93, %s96
      %p102 = scmp.eq.s32.totalorder %s17, 0
      %p103 = por %p101, %p102
      %p104 = scmp.ne.s32.totalorder %s93, %s96
      %p105 = scmp.eq.s32.totalorder %s22, 1
      %p106 = por %p104, %p105
      %p107 = scmp.ne.s32.totalorder %s96, %s97
      %p108 = scmp.eq.s32.totalorder %s22, 0
      %p109 = por %p107, %p108
      %p110 = scmp.ne.s32.totalorder %s96, %s97
      %p111 = scmp.eq.s32.totalorder %s23, 1
      %p112 = por %p110, %p111
      %p114 = scmp.ne.s32.totalorder %s97, %s113
      %p115 = scmp.eq.s32.totalorder %s23, 0
      %p116 = por %p114, %p115
      %s117 = ssub.s32 %s24, %s36
      %s118 = ssub.s32 %s25, %s32
      %s119 = sor.u32 %s117, %s118
      %p120 = scmp.eq.s32.totalorder %s119, 0
      %s122 = sadd.s32 %s121, 1
      %s123 = scalar_select %p120, %s121, %s122
      %p126 = pneg %p120
      %p127 = scmp.eq.s32.totalorder %s17, 1
      %p128 = por %p126, %p127
      %p129 = scmp.ne.s32.totalorder %s121, %s124
      %p130 = scmp.eq.s32.totalorder %s17, 0
      %p131 = por %p129, %p130
      %p132 = scmp.ne.s32.totalorder %s121, %s124
      %p133 = scmp.eq.s32.totalorder %s22, 1
      %p134 = por %p132, %p133
      %p135 = scmp.ne.s32.totalorder %s124, %s125
      %p136 = scmp.eq.s32.totalorder %s22, 0
      %p137 = por %p135, %p136
      %p138 = scmp.ne.s32.totalorder %s124, %s125
      %p139 = scmp.eq.s32.totalorder %s23, 1
      %p140 = por %p138, %p139
      %p142 = scmp.ne.s32.totalorder %s125, %s141
      %p143 = scmp.eq.s32.totalorder %s23, 0
      %p144 = por %p142, %p143
      %s146 = sadd.s32 %s145, 1
      %p149 = scmp.eq.s32.totalorder %s17, 1
      %p150 = scmp.ne.s32.totalorder %s145, %s147
      %p151 = scmp.eq.s32.totalorder %s17, 0
      %p152 = por %p150, %p151
      %p153 = scmp.ne.s32.totalorder %s145, %s147
      %p154 = scmp.eq.s32.totalorder %s22, 1
      %p155 = por %p153, %p154
      %p156 = scmp.ne.s32.totalorder %s147, %s148
      %p157 = scmp.eq.s32.totalorder %s22, 0
      %p158 = por %p156, %p157
      %p159 = scmp.ne.s32.totalorder %s147, %s148
      %p160 = scmp.eq.s32.totalorder %s23, 1
      %p161 = por %p159, %p160
      %p163 = scmp.ne.s32.totalorder %s148, %s162
      %p164 = scmp.eq.s32.totalorder %s23, 0
      %p165 = por %p163, %p164
      %s167 = sadd.s32 %s166, 1
      %p170 = scmp.eq.s32.totalorder %s17, 1
      %p171 = scmp.ne.s32.totalorder %s166, %s168
      %p172 = scmp.eq.s32.totalorder %s17, 0
      %p173 = por %p171, %p172
      %p174 = scmp.ne.s32.totalorder %s166, %s168
      %p175 = scmp.eq.s32.totalorder %s22, 1
      %p176 = por %p174, %p175
      %p177 = scmp.ne.s32.totalorder %s168, %s169
      %p178 = scmp.eq.s32.totalorder %s22, 0
      %p179 = por %p177, %p178
      %p180 = scmp.ne.s32.totalorder %s168, %s169
      %p181 = scmp.eq.s32.totalorder %s23, 1
      %p182 = por %p180, %p181
      %p184 = scmp.ne.s32.totalorder %s169, %s183
      %p185 = scmp.eq.s32.totalorder %s23, 0
      %p186 = por %p184, %p185
      %s188 = sadd.s32 %s187, 1
      %p191 = scmp.eq.s32.totalorder %s17, 1
      %p192 = scmp.ne.s32.totalorder %s187, %s189
      %p193 = scmp.eq.s32.totalorder %s17, 0
      %p194 = por %p192, %p193
      %p195 = scmp.ne.s32.totalorder %s187, %s189
      %p196 = scmp.eq.s32.totalorder %s22, 1
      %p197 = por %p195, %p196
      %p198 = scmp.ne.s32.totalorder %s189, %s190
      %p199 = scmp.eq.s32.totalorder %s22, 0
      %p200 = por %p198, %p199
      %p201 = scmp.ne.s32.totalorder %s189, %s190
      %p202 = scmp.eq.s32.totalorder %s23, 1
      %p203 = por %p201, %p202
      %p205 = scmp.ne.s32.totalorder %s190, %s204
      %p206 = scmp.eq.s32.totalorder %s23, 0
      %p207 = por %p205, %p206
      %s209 = sadd.s32 %s208, 1
      %p212 = scmp.eq.s32.totalorder %s17, 1
      %p213 = scmp.ne.s32.totalorder %s208, %s210
      %p214 = scmp.eq.s32.totalorder %s17, 0
      %p215 = por %p213, %p214
      %p216 = scmp.ne.s32.totalorder %s208, %s210
      %p217 = scmp.eq.s32.totalorder %s22, 1
      %p218 = por %p216, %p217
      %p219 = scmp.ne.s32.totalorder %s210, %s211
      %p220 = scmp.eq.s32.totalorder %s22, 0
      %p221 = por %p219, %p220
      %p222 = scmp.ne.s32.totalorder %s210, %s211
      %p223 = scmp.eq.s32.totalorder %s23, 1
      %p224 = por %p222, %p223
      %p226 = scmp.ne.s32.totalorder %s211, %s225
      %p227 = scmp.eq.s32.totalorder %s23, 0
      %p228 = por %p226, %p227
      %s229 = ssub.s32 %s24, %s36
      %s230 = ssub.s32 %s25, %s32
      %s231 = sor.u32 %s229, %s230
      %p232 = scmp.eq.s32.totalorder %s231, 0
      %s234 = sadd.s32 %s233, 1
      %s235 = scalar_select %p232, %s233, %s234
      %p238 = pneg %p232
      %p239 = scmp.eq.s32.totalorder %s17, 1
      %p240 = por %p238, %p239
      %p241 = scmp.ne.s32.totalorder %s233, %s236
      %p242 = scmp.eq.s32.totalorder %s17, 0
      %p243 = por %p241, %p242
      %p244 = scmp.ne.s32.totalorder %s233, %s236
      %p245 = scmp.eq.s32.totalorder %s22, 1
      %p246 = por %p244, %p245
      %p247 = scmp.ne.s32.totalorder %s236, %s237
      %p248 = scmp.eq.s32.totalorder %s22, 0
      %p249 = por %p247, %p248
      %p250 = scmp.ne.s32.totalorder %s236, %s237
      %p251 = scmp.eq.s32.totalorder %s23, 1
      %p252 = por %p250, %p251
      %p254 = scmp.ne.s32.totalorder %s237, %s253
      %p255 = scmp.eq.s32.totalorder %s23, 0
      %p256 = por %p254, %p255
      %p257 = scmp.le.s32.totalorder 1, %s17
      %p258 = scmp.lt.s32.totalorder %s17, 3
      %p259 = pnand %p257, %p258
      %p260 = pneg %p259
      // Predicated region
      $region9: #{tpu_custom_call.1} parent=5 // pred_check
        _
      $region10: #{tpu_custom_call.1} parent=5 // pred_check_branch
        %262 = sbr.rel (%p259) target = $region12
      $region11: #{tpu_custom_call.1} parent=5 // pred_region
        %s263 = ssub.s32 %s17, 1
        // Predicated region
        $region13: #{tpu_custom_call.1} parent=11 // pred_check
          %p264 = pneg %p158
        $region14: #{tpu_custom_call.1} parent=11 // pred_check_branch
          %266 = sbr.rel (%p264) target = $region16
        $region15: #{tpu_custom_call.1} parent=11 // pred_region
          _
        $region16: #{tpu_custom_call.1} parent=11 // pred_fallthru
          _
        // Predicated region
        $region17: #{tpu_custom_call.1} parent=11 // pred_check
          %p267 = pneg %p179
        $region18: #{tpu_custom_call.1} parent=11 // pred_check_branch
          %269 = sbr.rel (%p267) target = $region20
        $region19: #{tpu_custom_call.1} parent=11 // pred_region
          _
        $region20: #{tpu_custom_call.1} parent=11 // pred_fallthru
          _
        // Predicated region
        $region21: #{tpu_custom_call.1} parent=11 // pred_check
          %p270 = pneg %p200
        $region22: #{tpu_custom_call.1} parent=11 // pred_check_branch
          %272 = sbr.rel (%p270) target = $region24
        $region23: #{tpu_custom_call.1} parent=11 // pred_region
          _
        $region24: #{tpu_custom_call.1} parent=11 // pred_fallthru
          _
        // Predicated region
        $region25: #{tpu_custom_call.1} parent=11 // pred_check
          %p273 = pneg %p221
        $region26: #{tpu_custom_call.1} parent=11 // pred_check_branch
          %275 = sbr.rel (%p273) target = $region28
        $region27: #{tpu_custom_call.1} parent=11 // pred_region
          _
        $region28: #{tpu_custom_call.1} parent=11 // pred_fallthru
          _
      $region12: #{tpu_custom_call.1} parent=5 // pred_fallthru
        _
      %p276 = scmp.lt.s32.totalorder %s17, 2
      // Predicated region
      $region29: #{tpu_custom_call.1} parent=5 // pred_check
        %p277 = pneg %p276
      $region30: #{tpu_custom_call.1} parent=5 // pred_check_branch
        %279 = sbr.rel (%p277) target = $region32
      $region31: #{tpu_custom_call.1} parent=5 // pred_region
        // Predicated region
        $region33: #{tpu_custom_call.1} parent=31 // pred_check
          %p280 = pneg %p49
        $region34: #{tpu_custom_call.1} parent=31 // pred_check_branch
          %282 = sbr.rel (%p280) target = $region36
        $region35: #{tpu_custom_call.1} parent=31 // pred_region
          %p283 = scmp.lt.s32.totalorder %s24, 1
          %s284 = scalar_select %p283, %s24, 1
          %s285 = smul.addr %s284, 2
          %s286 = smul.addr %s285, 8
          %s287 = scalar_lea.vmem %s0, %s286
        $region36: #{tpu_custom_call.1} parent=31 // pred_fallthru
          _
        // Predicated region
        $region37: #{tpu_custom_call.1} parent=31 // pred_check
          %p288 = pneg %p77
        $region38: #{tpu_custom_call.1} parent=31 // pred_check_branch
          %290 = sbr.rel (%p288) target = $region40
        $region39: #{tpu_custom_call.1} parent=31 // pred_region
          %p291 = scmp.lt.s32.totalorder %s24, 1
          %s292 = scalar_select %p291, %s24, 1
          %p293 = scmp.lt.s32.totalorder %s25, 0
          %s294 = scalar_select %p293, %s25, 0
          %s295 = sadd.s32 %s294, %s292
          %s296 = smul.addr %s295, 4
          %s297 = scalar_lea.vmem %s1, %s296
        $region40: #{tpu_custom_call.1} parent=31 // pred_fallthru
          _
        // Predicated region
        $region41: #{tpu_custom_call.1} parent=31 // pred_check
          %p298 = pneg %p103
        $region42: #{tpu_custom_call.1} parent=31 // pred_check_branch
          %300 = sbr.rel (%p298) target = $region44
        $region43: #{tpu_custom_call.1} parent=31 // pred_region
          %p301 = scmp.lt.s32.totalorder %s24, 1
          %s302 = scalar_select %p301, %s24, 1
          %s303 = smul.addr %s302, 4
          %s304 = scalar_lea.vmem %s2, %s303
        $region44: #{tpu_custom_call.1} parent=31 // pred_fallthru
          _
        // Predicated region
        $region45: #{tpu_custom_call.1} parent=31 // pred_check
          %p305 = pneg %p131
        $region46: #{tpu_custom_call.1} parent=31 // pred_check_branch
          %307 = sbr.rel (%p305) target = $region48
        $region47: #{tpu_custom_call.1} parent=31 // pred_region
          %p308 = scmp.lt.s32.totalorder %s24, 1
          %s309 = scalar_select %p308, %s24, 1
          %p310 = scmp.lt.s32.totalorder %s25, 0
          %s311 = scalar_select %p310, %s25, 0
          %s312 = sadd.s32 %s311, %s309
          %s313 = smul.addr %s312, 4
          %s314 = scalar_lea.vmem %s3, %s313
        $region48: #{tpu_custom_call.1} parent=31 // pred_fallthru
          _
      $region32: #{tpu_custom_call.1} parent=5 // pred_fallthru
        _
      %p315 = scmp.le.s32.totalorder 1, %s17
      %p316 = scmp.lt.s32.totalorder %s17, 3
      %p317 = pnand %p315, %p316
      %p318 = pneg %p317
      // Predicated region
      $region49: #{tpu_custom_call.1} parent=5 // pred_check
        _
      $region50: #{tpu_custom_call.1} parent=5 // pred_check_branch
        %320 = sbr.rel (%p317) target = $region52
      $region51: #{tpu_custom_call.1} parent=5 // pred_region
        %s321 = ssub.s32 %s17, 1
        %p322 = scmp.lt.s32.totalorder %s26, 1
        %s323 = scalar_select %p322, %s26, 1
        %s324 = smul.addr %s323, 2
        %s325 = smul.addr %s324, 8
        %s326 = scalar_lea.vmem %s0, %s325
        %p327 = pneg %p55
        %p328 = pneg %p52
        %p329 = scmp.lt.s32.totalorder %s26, 1
        %s330 = scalar_select %p329, %s26, 1
        %p331 = scmp.lt.s32.totalorder %s27, 0
        %s332 = scalar_select %p331, %s27, 0
        %s333 = sadd.s32 %s332, %s330
        %s334 = smul.addr %s333, 4
        %s335 = scalar_lea.vmem %s1, %s334
        %p336 = pneg %p83
        %p337 = pneg %p80
        %p338 = scmp.lt.s32.totalorder %s26, 1
        %s339 = scalar_select %p338, %s26, 1
        %s340 = smul.addr %s339, 4
        %s341 = scalar_lea.vmem %s2, %s340
        %p342 = pneg %p109
        %p343 = pneg %p106
        %p344 = scmp.lt.s32.totalorder %s26, 1
        %s345 = scalar_select %p344, %s26, 1
        %p346 = scmp.lt.s32.totalorder %s27, 0
        %s347 = scalar_select %p346, %s27, 0
        %s348 = sadd.s32 %s347, %s345
        %s349 = smul.addr %s348, 4
        %s350 = scalar_lea.vmem %s3, %s349
        %p351 = pneg %p137
        %p352 = pneg %p134
        %p353 = pneg %p158
        %p354 = pneg %p155
        %p355 = pneg %p179
        %p356 = pneg %p176
        %p357 = pneg %p200
        %p358 = pneg %p197
        %p359 = pneg %p221
        %p360 = pneg %p218
        %p361 = pneg %p249
        %p362 = pneg %p246
        %s363 = sand.u32 %s236, 1
        %s364 = scalar_lea.sflag [#allocation4], %s363
        %s365 = sand.u32 %s236, 1
        %s366 = smul.addr %s365, 16
        %s367 = scalar_lea.vmem [#allocation3], %s366
        %p368 = scmp.lt.s32.totalorder %s26, 1
        %s369 = scalar_select %p368, %s26, 1
        %s370 = smul.addr %s369, 2
        %s371 = smul.addr %s370, 8
        %s372 = scalar_lea.vmem %s0, %s371
        %p373 = scmp.lt.s32.totalorder %s26, 1
        %s374 = scalar_select %p373, %s26, 1
        %p375 = scmp.lt.s32.totalorder %s27, 0
        %s376 = scalar_select %p375, %s27, 0
        %s377 = sadd.s32 %s376, %s374
        %s378 = smul.addr %s377, 4
        %s379 = scalar_lea.vmem %s1, %s378
        %p380 = scmp.lt.s32.totalorder %s26, 1
        %s381 = scalar_select %p380, %s26, 1
        %s382 = smul.addr %s381, 4
        %s383 = scalar_lea.vmem %s2, %s382
        %p384 = scmp.lt.s32.totalorder %s26, 1
        %s385 = scalar_select %p384, %s26, 1
        %p386 = scmp.lt.s32.totalorder %s27, 0
        %s387 = scalar_select %p386, %s27, 0
        %s388 = sadd.s32 %s387, %s385
        %s389 = smul.addr %s388, 4
        %s390 = scalar_lea.vmem %s3, %s389
        %p392 = scmp.eq.s32.totalorder %s27, 0
        // Predicated region
        $region53: #{tpu_custom_call.1} parent=51 // pred_check
          %p393 = pneg %p392
        $region54: #{tpu_custom_call.1} parent=51 // pred_check_branch
          %395 = sbr.rel (%p393) target = $region56
        $region55: #{tpu_custom_call.1} parent=51 // pred_region
          %v396 = vld [vmem:[%s4] sm:$0xf]
          %v397 = vld [vmem:[%s4 + $0x4] sm:$0xf]
          %v398 = vld [vmem:[%s383] sm:$0xf]
          %v399 = vld [vmem:[%s5] sm:$0xff]
          %v400 = vld [vmem:[%s5 + $0x8] sm:$0xff]
          %402 = vset.pattern.permute.xlu0 0
          %403 = vperm.xlu0 %402, %v399
          %v404 = vpop.permute.xlu0 %403
          %407 = vset.pattern.permute.xlu0 0
          %408 = vperm.xlu0 %407, %v400
          %v409 = vpop.permute.xlu0 %408
          %v413 = vunpack.c.l.b16 %v396
          %v414 = vunpack.c.l.b16 %v397
          %v415 = vpack.c.b16 %v414, %v413
          %vm416 = vcmask 64512
          %v418 = vsel %vm416, %v415, 0
          %vm420 = vcmask 1043456
          %v422 = vsel %vm420, %v398, 0
          %424 = vmatpush.bf16.msra.mxu0 0
          %425 = vmatpush.bf16.msra.mxu0 0
          %426 = vmatpush.bf16.msra.mxu0 0
          %427 = vmatpush.bf16.msra.mxu0 0
          %428 = vmatpush.bf16.msra.mxu0 0
          %429 = vmatpush.bf16.msra.mxu0 0
          %430 = vmatpush.bf16.msra.mxu0 0
          %431 = vmatpush.bf16.msra.mxu0 %v422
          %432 = vmatmul.bf16.gmra.mxu0 %v418
          %v433 = vpop.f32.mrf.mxu0
          %v434 = vadd.f32 %v404, %v433
          %v435 = vpop.f32.mrf.mxu0
          %v436 = vadd.f32 %v409, %v435
          %437 = vdwg.mxu0
          %v438 = vmax.f32 %v434, 0.0
          %v439 = vmax.f32 %v436, 0.0
          %v440 = vpack.c.bf16 %v438, %v438
          %v441 = vpack.c.bf16 %v439, %v439
          %vm442 = vcmask 125952
          %443 = vst.msk [vmem:[#allocation2] sm:$0xf] %vm442, %v440
          %444 = vst.msk [vmem:[#allocation2 + $0x4] sm:$0xf] %vm442, %v441
        $region56: #{tpu_custom_call.1} parent=51 // pred_fallthru
          _
        %v445 = vld [vmem:[%s6] sm:$0xf]
        %v446 = vld [vmem:[%s6 + $0x4] sm:$0xf]
        %v447 = vld [vmem:[%s390] sm:$0xf]
        %v448 = vld [vmem:[%s7] sm:$0xff]
        %v449 = vld [vmem:[%s7 + $0x8] sm:$0xff]
        %451 = vset.pattern.permute.xlu0 0
        %452 = vperm.xlu0 %451, %v448
        %v453 = vpop.permute.xlu0 %452
        %456 = vset.pattern.permute.xlu0 0
        %457 = vperm.xlu0 %456, %v449
        %v458 = vpop.permute.xlu0 %457
        %v462 = vunpack.c.l.b16 %v445
        %v463 = vunpack.c.l.b16 %v446
        %v464 = vpack.c.b16 %v463, %v462
        %vm465 = vcmask 64512
        %v467 = vsel %vm465, %v464, 0
        %vm469 = vcmask 1043456
        %v471 = vsel %vm469, %v447, 0
        %473 = vmatpush.bf16.msra.mxu0 0
        %474 = vmatpush.bf16.msra.mxu0 0
        %475 = vmatpush.bf16.msra.mxu0 0
        %476 = vmatpush.bf16.msra.mxu0 0
        %477 = vmatpush.bf16.msra.mxu0 0
        %478 = vmatpush.bf16.msra.mxu0 0
        %479 = vmatpush.bf16.msra.mxu0 0
        %480 = vmatpush.bf16.msra.mxu0 %v471
        %481 = vmatmul.bf16.gmra.mxu0 %v467
        %v482 = vpop.f32.mrf.mxu0
        %v483 = vadd.f32 %v453, %v482
        %v484 = vpop.f32.mrf.mxu0
        %v485 = vadd.f32 %v458, %v484
        %486 = vdwg.mxu0
        %v487 = vmax.f32 %v483, 0.0
        %v488 = vmax.f32 %v485, 0.0
        %v489 = vld [vmem:[%s372] sm:$0xff]
        %v490 = vld [vmem:[%s372 + $0x8] sm:$0xff]
        %v491 = vld [vmem:[%s379] sm:$0x7]
        %493 = vset.pattern.permute.xlu0 0
        %494 = vperm.xlu0 %493, %v489
        %v495 = vpop.permute.xlu0 %494
        %498 = vset.pattern.permute.xlu0 0
        %499 = vperm.xlu0 %498, %v490
        %v500 = vpop.permute.xlu0 %499
        %v502 = vperm.slane %v491, 0
        %v503 = vsub.f32 %v495, %v502
        %v504 = vsub.f32 %v500, %v502
        %v505 = vmul.f32 %v503, %v503
        %v506 = vmul.f32 %v504, %v504
        %507 = vset.pattern.permute.xlu0 1
        %508 = vperm.xlu0 %507, %v489
        %v509 = vpop.permute.xlu0 %508
        %511 = vset.pattern.permute.xlu0 1
        %512 = vperm.xlu0 %511, %v490
        %v513 = vpop.permute.xlu0 %512
        %v515 = vperm.slane %v491, 1
        %v516 = vsub.f32 %v509, %v515
        %v517 = vsub.f32 %v513, %v515
        %v518 = vmul.f32 %v516, %v516
        %v519 = vmul.f32 %v517, %v517
        %v520 = vadd.f32 %v505, %v518
        %v521 = vadd.f32 %v506, %v519
        %522 = vset.pattern.permute.xlu0 2
        %523 = vperm.xlu0 %522, %v489
        %v524 = vpop.permute.xlu0 %523
        %526 = vset.pattern.permute.xlu0 2
        %527 = vperm.xlu0 %526, %v490
        %v528 = vpop.permute.xlu0 %527
        %v530 = vperm.slane %v491, 2
        %v531 = vsub.f32 %v524, %v530
        %v532 = vsub.f32 %v528, %v530
        %v533 = vmul.f32 %v531, %v531
        %v534 = vmul.f32 %v532, %v532
        %v535 = vadd.f32 %v520, %v533
        %v536 = vadd.f32 %v521, %v534
        %v537 = vlaneseq
        %v538 = vshrl.u32 %v537, 7
        %v539 = vadd.s32 %v538, 8
        %v540 = vmin.f32 %v535, %v536
        %v541 = vrot.slane %v540, 4
        %v542 = vmin.f32 %v540, %v541
        %v543 = vrot.slane %v542, 2
        %v544 = vmin.f32 %v542, %v543
        %v545 = vrot.slane %v544, 1
        %v546 = vmin.f32 %v544, %v545
        %v547 = vadd.f32 %v546, 1e-08
        %v548 = vrcp.pop %v547
        %v549 = vadd.f32 %v548, 0.0
        %vm550 = vcmp.le.f32.partialorder %v535, %v546
        %vm551 = vcmp.le.f32.partialorder %v536, %v546
        %v552 = vsel %vm550, %v538, 16
        %v553 = vsel %vm551, %v539, 16
        %vm554 = vcmp.lt.s32.totalorder %v552, %v553
        %v555 = vsel %vm554, %v552, %v553
        %v556 = vrot.slane %v555, 4
        %vm557 = vcmp.lt.s32.totalorder %v555, %v556
        %v558 = vsel %vm557, %v555, %v556
        %v559 = vrot.slane %v558, 2
        %vm560 = vcmp.lt.s32.totalorder %v558, %v559
        %v561 = vsel %vm560, %v558, %v559
        %v562 = vrot.slane %v561, 1
        %vm563 = vcmp.lt.s32.totalorder %v561, %v562
        %v564 = vsel %vm563, %v561, %v562
        %vm565 = vcmp.eq.s32.totalorder %v538, %v564
        %vm566 = vcmp.eq.s32.totalorder %v539, %v564
        %v567 = vsel %vm565, %v548, 0.0
        %v568 = vsel %vm566, %v548, 0.0
        %v569 = vsel %vm565, inf, %v535
        %v570 = vsel %vm566, inf, %v536
        %v571 = vmin.f32 %v569, %v570
        %v572 = vrot.slane %v571, 4
        %v573 = vmin.f32 %v571, %v572
        %v574 = vrot.slane %v573, 2
        %v575 = vmin.f32 %v573, %v574
        %v576 = vrot.slane %v575, 1
        %v577 = vmin.f32 %v575, %v576
        %v578 = vadd.f32 %v577, 1e-08
        %v579 = vrcp.pop %v578
        %v580 = vadd.f32 %v549, %v579
        %vm581 = vcmp.le.f32.partialorder %v569, %v577
        %vm582 = vcmp.le.f32.partialorder %v570, %v577
        %v583 = vsel %vm581, %v538, 16
        %v584 = vsel %vm582, %v539, 16
        %vm585 = vcmp.lt.s32.totalorder %v583, %v584
        %v586 = vsel %vm585, %v583, %v584
        %v587 = vrot.slane %v586, 4
        %vm588 = vcmp.lt.s32.totalorder %v586, %v587
        %v589 = vsel %vm588, %v586, %v587
        %v590 = vrot.slane %v589, 2
        %vm591 = vcmp.lt.s32.totalorder %v589, %v590
        %v592 = vsel %vm591, %v589, %v590
        %v593 = vrot.slane %v592, 1
        %vm594 = vcmp.lt.s32.totalorder %v592, %v593
        %v595 = vsel %vm594, %v592, %v593
        %vm596 = vcmp.eq.s32.totalorder %v538, %v595
        %vm597 = vcmp.eq.s32.totalorder %v539, %v595
        %v598 = vsel %vm596, %v579, %v567
        %v599 = vsel %vm597, %v579, %v568
        %v600 = vsel %vm596, inf, %v569
        %v601 = vsel %vm597, inf, %v570
        %v602 = vmin.f32 %v600, %v601
        %v603 = vrot.slane %v602, 4
        %v604 = vmin.f32 %v602, %v603
        %v605 = vrot.slane %v604, 2
        %v606 = vmin.f32 %v604, %v605
        %v607 = vrot.slane %v606, 1
        %v608 = vmin.f32 %v606, %v607
        %v609 = vadd.f32 %v608, 1e-08
        %v610 = vrcp.pop %v609
        %v611 = vadd.f32 %v580, %v610
        %vm612 = vcmp.le.f32.partialorder %v600, %v608
        %vm613 = vcmp.le.f32.partialorder %v601, %v608
        %v614 = vsel %vm612, %v538, 16
        %v615 = vsel %vm613, %v539, 16
        %vm616 = vcmp.lt.s32.totalorder %v614, %v615
        %v617 = vsel %vm616, %v614, %v615
        %v618 = vrot.slane %v617, 4
        %vm619 = vcmp.lt.s32.totalorder %v617, %v618
        %v620 = vsel %vm619, %v617, %v618
        %v621 = vrot.slane %v620, 2
        %vm622 = vcmp.lt.s32.totalorder %v620, %v621
        %v623 = vsel %vm622, %v620, %v621
        %v624 = vrot.slane %v623, 1
        %vm625 = vcmp.lt.s32.totalorder %v623, %v624
        %v626 = vsel %vm625, %v623, %v624
        %vm627 = vcmp.eq.s32.totalorder %v538, %v626
        %vm628 = vcmp.eq.s32.totalorder %v539, %v626
        %v629 = vsel %vm627, %v610, %v598
        %v630 = vsel %vm628, %v610, %v599
        %v631 = vld [vmem:[#allocation2] sm:$0xf]
        %v632 = vld [vmem:[#allocation2 + $0x4] sm:$0xf]
        %v633 = vpack.c.bf16 %v630, %v629
        %v636 = vunpack.c.l.b16 %v631
        %v637 = vunpack.c.l.b16 %v632
        %v638 = vpack.c.b16 %v637, %v636
        %vm639 = vcmask 130048
        %v641 = vsel %vm639, %v638, 0
        %643 = vmatpush.bf16.msra.mxu0 0
        %644 = vmatpush.bf16.msra.mxu0 0
        %645 = vmatpush.bf16.msra.mxu0 0
        %646 = vmatpush.bf16.msra.mxu0 0
        %647 = vmatpush.bf16.msra.mxu0 0
        %648 = vmatpush.bf16.msra.mxu0 0
        %649 = vmatpush.bf16.msra.mxu0 0
        %650 = vmatpush.bf16.msra.mxu0 %v633
        %651 = vmatmul.bf16.gmra.mxu0 %v641
        %v652 = vpop.f32.mrf.mxu0
        %v653 = vadd.f32 0.0, %v652
        %v654 = vpop.f32.mrf.mxu0
        %v655 = vadd.f32 0.0, %v654
        %656 = vdwg.mxu0
        %v657 = vrcp.pop %v611
        %v658 = vmul.f32 %v653, %v657
        %v659 = vmul.f32 %v655, %v657
        %v660 = vadd.f32 %v487, %v658
        %v661 = vadd.f32 %v488, %v659
        %662 = vst [vmem:[%s367] sm:$0xff] %v660
        %663 = vst [vmem:[%s367 + $0x8] sm:$0xff] %v661
        %s664 = sand.u32 %s236, 1
        %s665 = scalar_lea.sflag [#allocation4], %s664
        %s666 = sand.u32 %s236, 1
        %s667 = smul.addr %s666, 16
        %s668 = scalar_lea.vmem [#allocation3], %s667
        // Predicated region
        $region57: #{tpu_custom_call.1} parent=51 // pred_check
          %p669 = pneg %p246
        $region58: #{tpu_custom_call.1} parent=51 // pred_check_branch
          %671 = sbr.rel (%p669) target = $region60
        $region59: #{tpu_custom_call.1} parent=51 // pred_region
          %673 = vsyncadd %s665, 0
          %s674 = smul.addr %s26, 2
          %s675 = sadd.s32 %s27, %s674
          %s676 = smul.addr %s675, 8
          %s677 = scalar_lea.hbm %s8, %s676
          %s678 = sshll.u32 %s668, 4
          %s679 = int_to_ptr.vmem [resolvable:$true] %s678
          %s680 = sshll.u32 %s677, 4
          %s681 = int_to_ptr.hbm [resolvable:$true] %s680
          %686 = dma.vmem_to_hbm [thread:$0]  %s679, 256, %s681, %s665, 128, 128, 8
        $region60: #{tpu_custom_call.1} parent=51 // pred_fallthru
          _
      $region52: #{tpu_custom_call.1} parent=5 // pred_fallthru
        _
      %p687 = scmp.le.s32.totalorder 2, %s17
      // Predicated region
      $region61: #{tpu_custom_call.1} parent=5 // pred_check
        %p688 = pneg %p687
      $region62: #{tpu_custom_call.1} parent=5 // pred_check_branch
        %690 = sbr.rel (%p688) target = $region64
      $region63: #{tpu_custom_call.1} parent=5 // pred_region
        %s691 = ssub.s32 %s17, 2
        // Predicated region
        $region65: #{tpu_custom_call.1} parent=63 // pred_check
          %p692 = pneg %p252
        $region66: #{tpu_custom_call.1} parent=63 // pred_check_branch
          %694 = sbr.rel (%p692) target = $region68
        $region67: #{tpu_custom_call.1} parent=63 // pred_region
          %s695 = sand.u32 %s237, 1
          %s696 = scalar_lea.sflag [#allocation4], %s695
          %s697 = sand.u32 %s237, 1
          %s698 = smul.addr %s697, 16
          %s699 = scalar_lea.vmem [#allocation3], %s698
          %701 = dma.done %s696, 256
        $region68: #{tpu_custom_call.1} parent=63 // pred_fallthru
          _
      $region64: #{tpu_custom_call.1} parent=5 // pred_fallthru
        _
    $region6: #{tpu_custom_call.1} parent=1 // loop_footer
      %s21 = sadd.s32 1, %s17
    $region7: #{tpu_custom_call.1} parent=1 // loop_footer_branch
      %16 = sbr.rel target = $region3
    $region8: #{tpu_custom_call.1} parent=1 // loop_exit
      _
    %702 = vsyncpa [#allocation4], 1
    %s703 = scalar_lea.sflag [#allocation4], 1
    %704 = vsyncpa %s703, 1

</llo_original>
